<compile_context>
chip_gen: v7x
topology: tpu7x:2x2x1
jax: 0.10.0
libtpu: 0.0.40
codegen_flags: <defaults>
</compile_context>

<pallas_src>
import jax
import jax.numpy as jnp
from jax.experimental import pallas as pl
from jax.experimental.pallas import tpu as pltpu

FEAT, FEAT_PAD = 4, 8
HIDDEN, HIDDEN_PAD = 100, 128
NCLASS, CLASS_PAD = 3, 128
NEG_BIG = -1e30  # bias for padded logit columns -> exp underflows to exactly 0


def irisnet_kernel(x_ref, w1_ref, b1_ref, w2_ref, b2_ref, o_ref):
    """Fused MLP forward on one batch tile.

    x_ref : (TB, 8)     f32, feature cols 4..7 are zero padding
    w1_ref: (8, 128)    f32, zero padded
    b1_ref: (1, 128)    f32, zero padded
    w2_ref: (128, 128)  f32, zero padded
    b2_ref: (1, 128)    f32, cols >= 3 are -1e30
    o_ref : (TB, 128)   f32, cols >= 3 come out as 0 (sliced off in wrapper)
    """
    x = x_ref[...]
    w1 = w1_ref[...]

    # fc1: K=4 contraction as 4 VPU broadcast-FMAs (MXU would be <1% utilized).
    h = b1_ref[...]  # (1,128) broadcasts against (TB,128)
    h = h + x[:, 0:1] * w1[0:1, :]
    h = h + x[:, 1:2] * w1[1:2, :]
    h = h + x[:, 2:3] * w1[2:3, :]
    h = h + x[:, 3:4] * w1[3:4, :]
    h = jnp.maximum(h, 0.0)  # (TB, 128)

    # fc2 on the MXU, full f32 precision, f32 accumulate.
    logits = jnp.dot(
        h, w2_ref[...],
        preferred_element_type=jnp.float32,
        precision=jax.lax.Precision.HIGHEST,
    ) + b2_ref[...]  # padded columns are ~ -1e30

    # Numerically stable softmax over the 3 real classes. Only 3 active lanes,
    # so combine explicit column slices on the VPU instead of XLU reductions.
    m = jnp.maximum(jnp.maximum(logits[:, 0:1], logits[:, 1:2]), logits[:, 2:3])
    e = jnp.exp(logits - m)                       # padded cols -> exp(-1e30) == 0
    denom = e[:, 0:1] + e[:, 1:2] + e[:, 2:3]     # (TB, 1)

    # EUP approx reciprocal + one Newton step (keeps the divide off the VALU,
    # restores ~full f32 precision).
    inv = pl.reciprocal(denom, approx=True)
    inv = inv * (2.0 - denom * inv)
    o_ref[...] = e * inv


def _pad2(a, shape, fill=0.0):
    out = jnp.full(shape, fill, a.dtype)
    return out.at[: a.shape[0], : a.shape[1]].set(a)


def _round_up(n, m):
    return ((n + m - 1) // m) * m


def irisnet_forward(x, w1, b1, w2, b2, *, batch_tile=512):
    """x: (B,4); w1: (4,100); b1: (1,100); w2: (100,3); b2: (1,3) -> (B,3)."""
    B = x.shape[0]

    # Pad parameters once to lane/sublane-aligned tiles. (In a real serving
    # setup this would be done at load time, not per call.)
    w1p = _pad2(w1.astype(jnp.float32), (FEAT_PAD, HIDDEN_PAD))
    b1p = _pad2(b1.astype(jnp.float32).reshape(1, HIDDEN), (1, HIDDEN_PAD))
    w2p = _pad2(w2.astype(jnp.float32), (HIDDEN_PAD, CLASS_PAD))
    b2p = _pad2(b2.astype(jnp.float32).reshape(1, NCLASS), (1, CLASS_PAD), fill=NEG_BIG)

    if B <= batch_tile:
        # Small batch: no grid at all -> no per-step pipeline bookkeeping.
        B_pad = _round_up(B, 8)
        xp = _pad2(x.astype(jnp.float32), (B_pad, FEAT_PAD))
        out = pl.pallas_call(
            irisnet_kernel,
            out_shape=jax.ShapeDtypeStruct((B_pad, CLASS_PAD), jnp.float32),
            in_specs=[pl.BlockSpec(memory_space=pltpu.MemorySpace.VMEM)] * 5,
            out_specs=pl.BlockSpec(memory_space=pltpu.MemorySpace.VMEM),
        )(xp, w1p, b1p, w2p, b2p)
        return out[:B, :NCLASS]

    # Large batch: tile the batch; weights/biases get constant block indices so
    # they stay VMEM-resident; batch axis is "parallel" (v7x dual-TC sharding).
    tb = _round_up(batch_tile, 8)
    B_pad = _round_up(B, tb)
    xp = _pad2(x.astype(jnp.float32), (B_pad, FEAT_PAD))
    out = pl.pallas_call(
        irisnet_kernel,
        out_shape=jax.ShapeDtypeStruct((B_pad, CLASS_PAD), jnp.float32),
        grid=(B_pad // tb,),
        in_specs=[
            pl.BlockSpec((tb, FEAT_PAD), lambda i: (i, 0)),
            pl.BlockSpec((FEAT_PAD, HIDDEN_PAD), lambda i: (0, 0)),
            pl.BlockSpec((1, HIDDEN_PAD), lambda i: (0, 0)),
            pl.BlockSpec((HIDDEN_PAD, CLASS_PAD), lambda i: (0, 0)),
            pl.BlockSpec((1, CLASS_PAD), lambda i: (0, 0)),
        ],
        out_specs=pl.BlockSpec((tb, CLASS_PAD), lambda i: (i, 0)),
        compiler_params=pltpu.CompilerParams(
            dimension_semantics=("parallel",)
        ),
    )(xp, w1p, b1p, w2p, b2p)
    return out[:B, :NCLASS]


def init_params(key):
    """Synthetic params matching nn.Linear shapes (weights stored as (in, out))."""
    k1, k2, k3, k4 = jax.random.split(key, 4)
    lim1 = 1.0 / jnp.sqrt(4.0)
    lim2 = 1.0 / jnp.sqrt(100.0)
    w1 = jax.random.uniform(k1, (FEAT, HIDDEN), jnp.float32, -lim1, lim1)
    b1 = jax.random.uniform(k2, (1, HIDDEN), jnp.float32, -lim1, lim1)
    w2 = jax.random.uniform(k3, (HIDDEN, NCLASS), jnp.float32, -lim2, lim2)
    b2 = jax.random.uniform(k4, (1, NCLASS), jnp.float32, -lim2, lim2)
    return w1, b1, w2, b2


def reference_forward(x, w1, b1, w2, b2):
    hp = jax.lax.Precision.HIGHEST
    h = jnp.maximum(jnp.dot(x, w1, precision=hp) + b1, 0.0)
    logits = jnp.dot(h, w2, precision=hp) + b2
    return jax.nn.softmax(logits, axis=1)


if __name__ == "__main__":
    key = jax.random.PRNGKey(0)
    kx, kp, kx2 = jax.random.split(key, 3)

    w1, b1, w2, b2 = init_params(kp)

    # Small-batch (grid-free) path.
    B = 8
    x = jax.random.normal(kx, (B, FEAT), dtype=jnp.float32)
    out = jax.block_until_ready(irisnet_forward(x, w1, b1, w2, b2))
    ref = reference_forward(x, w1, b1, w2, b2)
    assert out.shape == (B, NCLASS)
    assert jnp.allclose(out, ref, atol=1e-4, rtol=1e-4)
    assert jnp.allclose(jnp.sum(out, axis=1), jnp.ones((B,)), atol=1e-4)

    # Large-batch (tiled, "parallel" grid) path.
    B2 = 1024
    x2 = jax.random.normal(kx2, (B2, FEAT), dtype=jnp.float32)
    out2 = jax.block_until_ready(
        irisnet_forward(x2, w1, b1, w2, b2, batch_tile=256)
    )
    ref2 = reference_forward(x2, w1, b1, w2, b2)
    assert out2.shape == (B2, NCLASS)
    assert jnp.allclose(out2, ref2, atol=1e-4, rtol=1e-4)

    print("KERNEL_OK")
</pallas_src>

<mosaic_0001>
module attributes {stable_mosaic.version = 11 : i64} {
  func.func @irisnet_kernel(%arg0: memref<8x8xf32, #tpu.memory_space<vmem>>, %arg1: memref<8x128xf32, #tpu.memory_space<vmem>>, %arg2: memref<1x128xf32, #tpu.memory_space<vmem>>, %arg3: memref<128x128xf32, #tpu.memory_space<vmem>>, %arg4: memref<1x128xf32, #tpu.memory_space<vmem>>, %arg5: memref<8x128xf32, #tpu.memory_space<vmem>>) attributes {dimension_semantics = [], scalar_prefetch = 0 : i64, scratch_operands = 0 : i64, tpu.core_type = #tpu.core_type<tc>} {
    %c0 = arith.constant 0 : index
    %c0_0 = arith.constant 0 : index
    %0 = vector.load %arg0[%c0, %c0_0] : memref<8x8xf32, #tpu.memory_space<vmem>>, vector<8x8xf32>
    %c0_1 = arith.constant 0 : index
    %c0_2 = arith.constant 0 : index
    %1 = vector.load %arg1[%c0_1, %c0_2] : memref<8x128xf32, #tpu.memory_space<vmem>>, vector<8x128xf32>
    %c0_3 = arith.constant 0 : index
    %c0_4 = arith.constant 0 : index
    %2 = vector.load %arg2[%c0_3, %c0_4] : memref<1x128xf32, #tpu.memory_space<vmem>>, vector<1x128xf32>
    %3 = vector.extract_strided_slice %0 {offsets = [0, 0], sizes = [8, 1], strides = [1, 1]} : vector<8x8xf32> to vector<8x1xf32>
    %4 = vector.extract_strided_slice %1 {offsets = [0, 0], sizes = [1, 128], strides = [1, 1]} : vector<8x128xf32> to vector<1x128xf32>
    %5 = vector.broadcast %3 : vector<8x1xf32> to vector<8x128xf32>
    %6 = vector.broadcast %4 : vector<1x128xf32> to vector<8x128xf32>
    %7 = arith.mulf %5, %6 : vector<8x128xf32>
    %8 = vector.broadcast %2 : vector<1x128xf32> to vector<8x128xf32>
    %9 = arith.addf %8, %7 : vector<8x128xf32>
    %10 = vector.extract_strided_slice %0 {offsets = [0, 1], sizes = [8, 1], strides = [1, 1]} : vector<8x8xf32> to vector<8x1xf32>
    %11 = vector.extract_strided_slice %1 {offsets = [1, 0], sizes = [1, 128], strides = [1, 1]} : vector<8x128xf32> to vector<1x128xf32>
    %12 = vector.broadcast %10 : vector<8x1xf32> to vector<8x128xf32>
    %13 = vector.broadcast %11 : vector<1x128xf32> to vector<8x128xf32>
    %14 = arith.mulf %12, %13 : vector<8x128xf32>
    %15 = arith.addf %9, %14 : vector<8x128xf32>
    %16 = vector.extract_strided_slice %0 {offsets = [0, 2], sizes = [8, 1], strides = [1, 1]} : vector<8x8xf32> to vector<8x1xf32>
    %17 = vector.extract_strided_slice %1 {offsets = [2, 0], sizes = [1, 128], strides = [1, 1]} : vector<8x128xf32> to vector<1x128xf32>
    %18 = vector.broadcast %16 : vector<8x1xf32> to vector<8x128xf32>
    %19 = vector.broadcast %17 : vector<1x128xf32> to vector<8x128xf32>
    %20 = arith.mulf %18, %19 : vector<8x128xf32>
    %21 = arith.addf %15, %20 : vector<8x128xf32>
    %22 = vector.extract_strided_slice %0 {offsets = [0, 3], sizes = [8, 1], strides = [1, 1]} : vector<8x8xf32> to vector<8x1xf32>
    %23 = vector.extract_strided_slice %1 {offsets = [3, 0], sizes = [1, 128], strides = [1, 1]} : vector<8x128xf32> to vector<1x128xf32>
    %24 = vector.broadcast %22 : vector<8x1xf32> to vector<8x128xf32>
    %25 = vector.broadcast %23 : vector<1x128xf32> to vector<8x128xf32>
    %26 = arith.mulf %24, %25 : vector<8x128xf32>
    %27 = arith.addf %21, %26 : vector<8x128xf32>
    %cst = arith.constant 0.000000e+00 : f32
    %28 = vector.broadcast %cst : f32 to vector<8x128xf32>
    %29 = arith.maximumf %27, %28 : vector<8x128xf32>
    %c0_5 = arith.constant 0 : index
    %c0_6 = arith.constant 0 : index
    %30 = vector.load %arg3[%c0_5, %c0_6] : memref<128x128xf32, #tpu.memory_space<vmem>>, vector<128x128xf32>
    %cst_7 = arith.constant dense<0.000000e+00> : vector<8x128xf32>
    %31 = tpu.matmul %29, %30, %cst_7 {dimension_numbers = #tpu.dot_dimension_numbers<[1], [0], [0], [1], [0, 0, 1, 1], [], []>, precision = #tpu.contract_precision<fp32>} : vector<8x128xf32>, vector<128x128xf32>, vector<8x128xf32> -> vector<8x128xf32>
    %c0_8 = arith.constant 0 : index
    %c0_9 = arith.constant 0 : index
    %32 = vector.load %arg4[%c0_8, %c0_9] : memref<1x128xf32, #tpu.memory_space<vmem>>, vector<1x128xf32>
    %33 = vector.broadcast %32 : vector<1x128xf32> to vector<8x128xf32>
    %34 = arith.addf %31, %33 : vector<8x128xf32>
    %35 = vector.extract_strided_slice %34 {offsets = [0, 0], sizes = [8, 1], strides = [1, 1]} : vector<8x128xf32> to vector<8x1xf32>
    %36 = vector.extract_strided_slice %34 {offsets = [0, 1], sizes = [8, 1], strides = [1, 1]} : vector<8x128xf32> to vector<8x1xf32>
    %37 = arith.maximumf %35, %36 : vector<8x1xf32>
    %38 = vector.extract_strided_slice %34 {offsets = [0, 2], sizes = [8, 1], strides = [1, 1]} : vector<8x128xf32> to vector<8x1xf32>
    %39 = arith.maximumf %37, %38 : vector<8x1xf32>
    %40 = vector.broadcast %39 : vector<8x1xf32> to vector<8x128xf32>
    %41 = arith.subf %34, %40 : vector<8x128xf32>
    %42 = math.exp %41 : vector<8x128xf32>
    %43 = vector.extract_strided_slice %42 {offsets = [0, 0], sizes = [8, 1], strides = [1, 1]} : vector<8x128xf32> to vector<8x1xf32>
    %44 = vector.extract_strided_slice %42 {offsets = [0, 1], sizes = [8, 1], strides = [1, 1]} : vector<8x128xf32> to vector<8x1xf32>
    %45 = arith.addf %43, %44 : vector<8x1xf32>
    %46 = vector.extract_strided_slice %42 {offsets = [0, 2], sizes = [8, 1], strides = [1, 1]} : vector<8x128xf32> to vector<8x1xf32>
    %47 = arith.addf %45, %46 : vector<8x1xf32>
    %48 = tpu.reciprocal %47 {approx = true} : vector<8x1xf32> -> vector<8x1xf32>
    %49 = arith.mulf %47, %48 : vector<8x1xf32>
    %cst_10 = arith.constant 2.000000e+00 : f32
    %50 = vector.broadcast %cst_10 : f32 to vector<8x1xf32>
    %51 = arith.subf %50, %49 : vector<8x1xf32>
    %52 = arith.mulf %48, %51 : vector<8x1xf32>
    %53 = vector.broadcast %52 : vector<8x1xf32> to vector<8x128xf32>
    %54 = arith.mulf %42, %53 : vector<8x128xf32>
    %c0_11 = arith.constant 0 : index
    %c0_12 = arith.constant 0 : index
    %55 = vector.load %arg5[%c0_11, %c0_12] : memref<8x128xf32, #tpu.memory_space<vmem>>, vector<8x128xf32>
    tpu.vector_store %arg5[%c0_11, %c0_12], %54 {strides = array<i32>} : memref<8x128xf32, #tpu.memory_space<vmem>>, vector<8x128xf32>,
    return
  }
}

</mosaic_0001>

<llo_original>
// kernel: tpu_custom_call.1
$region0: #{tpu_custom_call.1}
  #allocation0 [shape = 'u32[]', space=smem, size = 0x4, offset = 0x4, fixed_abs, tag = 'smem constant byte address 0x4 - core index']
  #allocation1 [shape = 'u32[144,128]{1,0:T(1,128)}', space=vmem, size = 0x12000, scoped, tag = 'internal scratch']
  %s0 = inlined_call_operand.hbm [shape: f32[8,8], index: 0, kind: input, shape index: {}]
  %s1 = inlined_call_operand.hbm [shape: f32[8,128], index: 1, kind: input, shape index: {}]
  %s2 = inlined_call_operand.vmem [shape: f32[1,128], index: 2, kind: input, shape index: {}]
  %s3 = inlined_call_operand.hbm [shape: f32[128,128], index: 3, kind: input, shape index: {}]
  %s4 = inlined_call_operand.vmem [shape: f32[1,128], index: 4, kind: input, shape index: {}]
  %s5 = inlined_call_operand.hbm [shape: f32[8,128], index: 5, kind: output, shape index: {}]
  %s6 = sld [smem:[#allocation0]]
  $region42: #{tpu_custom_call.1} parent=0
    _
  %s8 = ssub.s32 1, %s6
  %s9 = scalar_select 0, %s8, %s6
  $region1: #{tpu_custom_call.1} parent=0
    #allocation2 [shape = 'u8[4096]{0}', space=vmem, size = 0x1000, scoped, tag = 'input window, operand 0, single buffered']
    #allocation3 [shape = 's32[1]{0}', space=sflag, size = 0x4, scoped, tag = 'scoped memory for tpu_custom_call.1']
    #allocation4 [shape = 's32[1]{0}', space=sflag, size = 0x4, scoped, tag = 'scoped memory for tpu_custom_call.1']
    #allocation5 [shape = 'u8[4096]{0}', space=vmem, size = 0x1000, scoped, tag = 'input window, operand 1, single buffered']
    #allocation6 [shape = 's32[1]{0}', space=sflag, size = 0x4, scoped, tag = 'scoped memory for tpu_custom_call.1']
    #allocation7 [shape = 'u8[65536]{0}', space=vmem, size = 0x10000, scoped, tag = 'input window, operand 3, single buffered']
    #allocation8 [shape = 'u8[4096]{0}', space=vmem, size = 0x1000, scoped, tag = 'output window, operand 0, single buffered']
    %10 = vsyncpa [#allocation3], 0
    %11 = vsyncpa [#allocation6], 0
    %12 = vsyncpa [#allocation4], 0
    // Predicated region
    $region2: #{tpu_custom_call.1} parent=1 // pred_check
      _
    $region3: #{tpu_custom_call.1} parent=1 // pred_check_branch
      %14 = sbr.rel (0) target = $region5
    $region4: #{tpu_custom_call.1} parent=1 // pred_region
      %s16 = ssub.s32 128, 128
      %17 = vsyncadd [#allocation3], %s16
      %s19 = sshll.u32 [#allocation2], 4
      %s20 = int_to_ptr.vmem [resolvable:$true] %s19
      %22 = dma.hbm_to_vmem [thread:$0]  %s0, 128, %s20, [#allocation3]
    $region5: #{tpu_custom_call.1} parent=1 // pred_fallthru
      _
    // Predicated region
    $region6: #{tpu_custom_call.1} parent=1 // pred_check
      _
    $region7: #{tpu_custom_call.1} parent=1 // pred_check_branch
      %24 = sbr.rel (0) target = $region9
    $region8: #{tpu_custom_call.1} parent=1 // pred_region
      %s26 = ssub.s32 128, 128
      %27 = vsyncadd [#allocation6], %s26
      %s29 = sshll.u32 [#allocation5], 4
      %s30 = int_to_ptr.vmem [resolvable:$true] %s29
      %32 = dma.hbm_to_vmem [thread:$0]  %s1, 128, %s30, [#allocation6]
    $region9: #{tpu_custom_call.1} parent=1 // pred_fallthru
      _
    // Predicated region
    $region10: #{tpu_custom_call.1} parent=1 // pred_check
      _
    $region11: #{tpu_custom_call.1} parent=1 // pred_check_branch
      %34 = sbr.rel (0) target = $region13
    $region12: #{tpu_custom_call.1} parent=1 // pred_region
      _
    $region13: #{tpu_custom_call.1} parent=1 // pred_fallthru
      _
    // Predicated region
    $region14: #{tpu_custom_call.1} parent=1 // pred_check
      _
    $region15: #{tpu_custom_call.1} parent=1 // pred_check_branch
      %36 = sbr.rel (0) target = $region17
    $region16: #{tpu_custom_call.1} parent=1 // pred_region
      %s38 = ssub.s32 2048, 2048
      %39 = vsyncadd [#allocation6], %s38
      %s40 = sshll.u32 [#allocation7], 4
      %s41 = int_to_ptr.vmem [resolvable:$true] %s40
      %46 = dma.hbm_to_vmem [thread:$0]  %s3, 2048, %s41, [#allocation6], 128, 128, 8
    $region17: #{tpu_custom_call.1} parent=1 // pred_fallthru
      _
    // Predicated region
    $region18: #{tpu_custom_call.1} parent=1 // pred_check
      _
    $region19: #{tpu_custom_call.1} parent=1 // pred_check_branch
      %48 = sbr.rel (0) target = $region21
    $region20: #{tpu_custom_call.1} parent=1 // pred_region
      _
    $region21: #{tpu_custom_call.1} parent=1 // pred_fallthru
      _
    // Predicated region
    $region22: #{tpu_custom_call.1} parent=1 // pred_check
      _
    $region23: #{tpu_custom_call.1} parent=1 // pred_check_branch
      %50 = sbr.rel (0) target = $region25
    $region24: #{tpu_custom_call.1} parent=1 // pred_region
      %51 = dma.done [#allocation3], 128
    $region25: #{tpu_custom_call.1} parent=1 // pred_fallthru
      _
    // Predicated region
    $region26: #{tpu_custom_call.1} parent=1 // pred_check
      _
    $region27: #{tpu_custom_call.1} parent=1 // pred_check_branch
      %53 = sbr.rel (0) target = $region29
    $region28: #{tpu_custom_call.1} parent=1 // pred_region
      %54 = dma.done [#allocation6], 128
    $region29: #{tpu_custom_call.1} parent=1 // pred_fallthru
      _
    // Predicated region
    $region30: #{tpu_custom_call.1} parent=1 // pred_check
      _
    $region31: #{tpu_custom_call.1} parent=1 // pred_check_branch
      %56 = sbr.rel (0) target = $region33
    $region32: #{tpu_custom_call.1} parent=1 // pred_region
      %57 = dma.done [#allocation6], 2048
    $region33: #{tpu_custom_call.1} parent=1 // pred_fallthru
      _
    %v58 = vld [vmem:[#allocation2] sm:$0xff]
    %v59 = vld [vmem:[#allocation5] sm:$0xff]
    %v60 = vld [vmem:[%s2] sm:$0x1]
    %62 = vset.pattern.permute.xlu0 0
    %63 = vperm.xlu0 %62, %v58
    %v64 = vpop.permute.xlu0 %63
    %v66 = vlaneseq
    %v67 = vshrl.u32 %v66, 7
    %v68 = vsub.s32 0, %v67
    %v69 = vrot.slane %v59, %v68
    %v70 = vmul.f32 %v64, %v69
    %v72 = vlaneseq
    %v73 = vshrl.u32 %v72, 7
    %v74 = vsub.s32 0, %v73
    %v75 = vrot.slane %v60, %v74
    %v77 = vadd.f32 %v75, %v70
    %78 = vset.pattern.permute.xlu0 1
    %79 = vperm.xlu0 %78, %v58
    %v80 = vpop.permute.xlu0 %79
    %v82 = vlaneseq
    %v83 = vshrl.u32 %v82, 7
    %v84 = vsub.s32 1, %v83
    %v85 = vrot.slane %v59, %v84
    %v86 = vmul.f32 %v80, %v85
    %v87 = vadd.f32 %v77, %v86
    %88 = vset.pattern.permute.xlu0 2
    %89 = vperm.xlu0 %88, %v58
    %v90 = vpop.permute.xlu0 %89
    %v92 = vlaneseq
    %v93 = vshrl.u32 %v92, 7
    %v94 = vsub.s32 2, %v93
    %v95 = vrot.slane %v59, %v94
    %v96 = vmul.f32 %v90, %v95
    %v97 = vadd.f32 %v87, %v96
    %98 = vset.pattern.permute.xlu0 3
    %99 = vperm.xlu0 %98, %v58
    %v100 = vpop.permute.xlu0 %99
    %v102 = vlaneseq
    %v103 = vshrl.u32 %v102, 7
    %v104 = vsub.s32 3, %v103
    %v105 = vrot.slane %v59, %v104
    %v106 = vmul.f32 %v100, %v105
    %v107 = vadd.f32 %v97, %v106
    %v108 = vmax.f32 %v107, 0.0
    %v109 = vld [vmem:[#allocation7] sm:$0xff]
    %v110 = vld [vmem:[#allocation7 + $0x8] sm:$0xff]
    %v111 = vld [vmem:[#allocation7 + $0x10] sm:$0xff]
    %v112 = vld [vmem:[#allocation7 + $0x18] sm:$0xff]
    %v113 = vld [vmem:[#allocation7 + $0x20] sm:$0xff]
    %v114 = vld [vmem:[#allocation7 + $0x28] sm:$0xff]
    %v115 = vld [vmem:[#allocation7 + $0x30] sm:$0xff]
    %v116 = vld [vmem:[#allocation7 + $0x38] sm:$0xff]
    %v117 = vld [vmem:[#allocation7 + $0x40] sm:$0xff]
    %v118 = vld [vmem:[#allocation7 + $0x48] sm:$0xff]
    %v119 = vld [vmem:[#allocation7 + $0x50] sm:$0xff]
    %v120 = vld [vmem:[#allocation7 + $0x58] sm:$0xff]
    %v121 = vld [vmem:[#allocation7 + $0x60] sm:$0xff]
    %v122 = vld [vmem:[#allocation7 + $0x68] sm:$0xff]
    %v123 = vld [vmem:[#allocation7 + $0x70] sm:$0xff]
    %v124 = vld [vmem:[#allocation7 + $0x78] sm:$0xff]
    %v125 = vld [vmem:[%s4] sm:$0x1]
    %v127 = vlaneseq
    %v128 = vshrl.u32 %v127, 7
    %v129 = vsub.s32 0, %v128
    %v130 = vrot.slane %v125, %v129
    %132 = vmatprep.subr.mxu0 0.0
    %v133 = vand.u32 %v109, 4294901760
    %134 = vmatpush1.msra.mxu0 %v133
    %135 = vmatprep.subr.mxu0 0.0
    %v136 = vand.u32 %v110, 4294901760
    %137 = vmatpush1.msra.mxu0 %v136
    %138 = vmatprep.subr.mxu0 0.0
    %v139 = vand.u32 %v111, 4294901760
    %140 = vmatpush1.msra.mxu0 %v139
    %141 = vmatprep.subr.mxu0 0.0
    %v142 = vand.u32 %v112, 4294901760
    %143 = vmatpush1.msra.mxu0 %v142
    %144 = vmatprep.subr.mxu0 0.0
    %v145 = vand.u32 %v113, 4294901760
    %146 = vmatpush1.msra.mxu0 %v145
    %147 = vmatprep.subr.mxu0 0.0
    %v148 = vand.u32 %v114, 4294901760
    %149 = vmatpush1.msra.mxu0 %v148
    %150 = vmatprep.subr.mxu0 0.0
    %v151 = vand.u32 %v115, 4294901760
    %152 = vmatpush1.msra.mxu0 %v151
    %153 = vmatprep.subr.mxu0 0.0
    %v154 = vand.u32 %v116, 4294901760
    %155 = vmatpush1.msra.mxu0 %v154
    %156 = vmatprep.subr.mxu0 0.0
    %v157 = vand.u32 %v117, 4294901760
    %158 = vmatpush1.msra.mxu0 %v157
    %159 = vmatprep.subr.mxu0 0.0
    %v160 = vand.u32 %v118, 4294901760
    %161 = vmatpush1.msra.mxu0 %v160
    %162 = vmatprep.subr.mxu0 0.0
    %v163 = vand.u32 %v119, 4294901760
    %164 = vmatpush1.msra.mxu0 %v163
    %165 = vmatprep.subr.mxu0 0.0
    %v166 = vand.u32 %v120, 4294901760
    %167 = vmatpush1.msra.mxu0 %v166
    %168 = vmatprep.subr.mxu0 0.0
    %v169 = vand.u32 %v121, 4294901760
    %170 = vmatpush1.msra.mxu0 %v169
    %171 = vmatprep.subr.mxu0 0.0
    %v172 = vand.u32 %v122, 4294901760
    %173 = vmatpush1.msra.mxu0 %v172
    %174 = vmatprep.subr.mxu0 0.0
    %v175 = vand.u32 %v123, 4294901760
    %176 = vmatpush1.msra.mxu0 %v175
    %177 = vmatprep.subr.mxu0 0.0
    %v178 = vand.u32 %v124, 4294901760
    %179 = vmatpush1.msra.mxu0 %v178
    %180 = vmatprep.subr.mxu0 0.0
    %181 = vmatpush1.msra.mxu0 0.0
    %182 = vmatprep.subr.mxu0 0.0
    %183 = vmatpush1.msra.mxu0 0.0
    %184 = vmatprep.subr.mxu0 0.0
    %185 = vmatpush1.msra.mxu0 0.0
    %186 = vmatprep.subr.mxu0 0.0
    %187 = vmatpush1.msra.mxu0 0.0
    %188 = vmatprep.subr.mxu0 0.0
    %189 = vmatpush1.msra.mxu0 0.0
    %190 = vmatprep.subr.mxu0 0.0
    %191 = vmatpush1.msra.mxu0 0.0
    %192 = vmatprep.subr.mxu0 0.0
    %193 = vmatpush1.msra.mxu0 0.0
    %194 = vmatprep.subr.mxu0 0.0
    %195 = vmatpush1.msra.mxu0 0.0
    %196 = vmatprep.subr.mxu0 0.0
    %197 = vmatpush1.msra.mxu0 0.0
    %198 = vmatprep.subr.mxu0 0.0
    %199 = vmatpush1.msra.mxu0 0.0
    %200 = vmatprep.subr.mxu0 0.0
    %201 = vmatpush1.msra.mxu0 0.0
    %202 = vmatprep.subr.mxu0 0.0
    %203 = vmatpush1.msra.mxu0 0.0
    %204 = vmatprep.subr.mxu0 0.0
    %205 = vmatpush1.msra.mxu0 0.0
    %206 = vmatprep.subr.mxu0 0.0
    %207 = vmatpush1.msra.mxu0 0.0
    %208 = vmatprep.subr.mxu0 0.0
    %209 = vmatpush1.msra.mxu0 0.0
    %210 = vmatprep.subr.mxu0 0.0
    %211 = vmatpush1.msra.mxu0 0.0
    %212 = vmatprep.mubr.f32.mxu0 0.0
    %v213 = vand.u32 %v108, 4294901760
    %v214 = vsub.f32 %v108, %v213
    %v215 = vand.u32 %v214, 4294901760
    %v216 = vsub.f32 %v214, %v215
    %v217 = vand.u32 %v216, 4294901760
    %218 = vmatmul.mubr.f32.gmra.mrb[0].mxu0 %v217
    %v219 = vpop.f32.mrb[0].mxu0
    %v220 = vadd.f32 %v130, %v219
    %v221 = vpop.f32.mrb[0].mxu0
    %222 = vdwg.mxu0
    %223 = vmatprep.subr.mxu0 0.0
    %v224 = vand.u32 %v109, 4294901760
    %v225 = vsub.f32 %v109, %v224
    %v226 = vand.u32 %v225, 4294901760
    %v227 = vsub.f32 %v225, %v226
    %v228 = vand.u32 %v227, 4294901760
    %229 = vmatpush1.msra.mxu0 %v228
    %230 = vmatprep.subr.mxu0 0.0
    %v231 = vand.u32 %v110, 4294901760
    %v232 = vsub.f32 %v110, %v231
    %v233 = vand.u32 %v232, 4294901760
    %v234 = vsub.f32 %v232, %v233
    %v235 = vand.u32 %v234, 4294901760
    %236 = vmatpush1.msra.mxu0 %v235
    %237 = vmatprep.subr.mxu0 0.0
    %v238 = vand.u32 %v111, 4294901760
    %v239 = vsub.f32 %v111, %v238
    %v240 = vand.u32 %v239, 4294901760
    %v241 = vsub.f32 %v239, %v240
    %v242 = vand.u32 %v241, 4294901760
    %243 = vmatpush1.msra.mxu0 %v242
    %244 = vmatprep.subr.mxu0 0.0
    %v245 = vand.u32 %v112, 4294901760
    %v246 = vsub.f32 %v112, %v245
    %v247 = vand.u32 %v246, 4294901760
    %v248 = vsub.f32 %v246, %v247
    %v249 = vand.u32 %v248, 4294901760
    %250 = vmatpush1.msra.mxu0 %v249
    %251 = vmatprep.subr.mxu0 0.0
    %v252 = vand.u32 %v113, 4294901760
    %v253 = vsub.f32 %v113, %v252
    %v254 = vand.u32 %v253, 4294901760
    %v255 = vsub.f32 %v253, %v254
    %v256 = vand.u32 %v255, 4294901760
    %257 = vmatpush1.msra.mxu0 %v256
    %258 = vmatprep.subr.mxu0 0.0
    %v259 = vand.u32 %v114, 4294901760
    %v260 = vsub.f32 %v114, %v259
    %v261 = vand.u32 %v260, 4294901760
    %v262 = vsub.f32 %v260, %v261
    %v263 = vand.u32 %v262, 4294901760
    %264 = vmatpush1.msra.mxu0 %v263
    %265 = vmatprep.subr.mxu0 0.0
    %v266 = vand.u32 %v115, 4294901760
    %v267 = vsub.f32 %v115, %v266
    %v268 = vand.u32 %v267, 4294901760
    %v269 = vsub.f32 %v267, %v268
    %v270 = vand.u32 %v269, 4294901760
    %271 = vmatpush1.msra.mxu0 %v270
    %272 = vmatprep.subr.mxu0 0.0
    %v273 = vand.u32 %v116, 4294901760
    %v274 = vsub.f32 %v116, %v273
    %v275 = vand.u32 %v274, 4294901760
    %v276 = vsub.f32 %v274, %v275
    %v277 = vand.u32 %v276, 4294901760
    %278 = vmatpush1.msra.mxu0 %v277
    %279 = vmatprep.subr.mxu0 0.0
    %v280 = vand.u32 %v117, 4294901760
    %v281 = vsub.f32 %v117, %v280
    %v282 = vand.u32 %v281, 4294901760
    %v283 = vsub.f32 %v281, %v282
    %v284 = vand.u32 %v283, 4294901760
    %285 = vmatpush1.msra.mxu0 %v284
    %286 = vmatprep.subr.mxu0 0.0
    %v287 = vand.u32 %v118, 4294901760
    %v288 = vsub.f32 %v118, %v287
    %v289 = vand.u32 %v288, 4294901760
    %v290 = vsub.f32 %v288, %v289
    %v291 = vand.u32 %v290, 4294901760
    %292 = vmatpush1.msra.mxu0 %v291
    %293 = vmatprep.subr.mxu0 0.0
    %v294 = vand.u32 %v119, 4294901760
    %v295 = vsub.f32 %v119, %v294
    %v296 = vand.u32 %v295, 4294901760
    %v297 = vsub.f32 %v295, %v296
    %v298 = vand.u32 %v297, 4294901760
    %299 = vmatpush1.msra.mxu0 %v298
    %300 = vmatprep.subr.mxu0 0.0
    %v301 = vand.u32 %v120, 4294901760
    %v302 = vsub.f32 %v120, %v301
    %v303 = vand.u32 %v302, 4294901760
    %v304 = vsub.f32 %v302, %v303
    %v305 = vand.u32 %v304, 4294901760
    %306 = vmatpush1.msra.mxu0 %v305
    %307 = vmatprep.subr.mxu0 0.0
    %v308 = vand.u32 %v121, 4294901760
    %v309 = vsub.f32 %v121, %v308
    %v310 = vand.u32 %v309, 4294901760
    %v311 = vsub.f32 %v309, %v310
    %v312 = vand.u32 %v311, 4294901760
    %313 = vmatpush1.msra.mxu0 %v312
    %314 = vmatprep.subr.mxu0 0.0
    %v315 = vand.u32 %v122, 4294901760
    %v316 = vsub.f32 %v122, %v315
    %v317 = vand.u32 %v316, 4294901760
    %v318 = vsub.f32 %v316, %v317
    %v319 = vand.u32 %v318, 4294901760
    %320 = vmatpush1.msra.mxu0 %v319
    %321 = vmatprep.subr.mxu0 0.0
    %v322 = vand.u32 %v123, 4294901760
    %v323 = vsub.f32 %v123, %v322
    %v324 = vand.u32 %v323, 4294901760
    %v325 = vsub.f32 %v323, %v324
    %v326 = vand.u32 %v325, 4294901760
    %327 = vmatpush1.msra.mxu0 %v326
    %328 = vmatprep.subr.mxu0 0.0
    %v329 = vand.u32 %v124, 4294901760
    %v330 = vsub.f32 %v124, %v329
    %v331 = vand.u32 %v330, 4294901760
    %v332 = vsub.f32 %v330, %v331
    %v333 = vand.u32 %v332, 4294901760
    %334 = vmatpush1.msra.mxu0 %v333
    %335 = vmatprep.subr.mxu0 0.0
    %336 = vmatpush1.msra.mxu0 0.0
    %337 = vmatprep.subr.mxu0 0.0
    %338 = vmatpush1.msra.mxu0 0.0
    %339 = vmatprep.subr.mxu0 0.0
    %340 = vmatpush1.msra.mxu0 0.0
    %341 = vmatprep.subr.mxu0 0.0
    %342 = vmatpush1.msra.mxu0 0.0
    %343 = vmatprep.subr.mxu0 0.0
    %344 = vmatpush1.msra.mxu0 0.0
    %345 = vmatprep.subr.mxu0 0.0
    %346 = vmatpush1.msra.mxu0 0.0
    %347 = vmatprep.subr.mxu0 0.0
    %348 = vmatpush1.msra.mxu0 0.0
    %349 = vmatprep.subr.mxu0 0.0
    %350 = vmatpush1.msra.mxu0 0.0
    %351 = vmatprep.subr.mxu0 0.0
    %352 = vmatpush1.msra.mxu0 0.0
    %353 = vmatprep.subr.mxu0 0.0
    %354 = vmatpush1.msra.mxu0 0.0
    %355 = vmatprep.subr.mxu0 0.0
    %356 = vmatpush1.msra.mxu0 0.0
    %357 = vmatprep.subr.mxu0 0.0
    %358 = vmatpush1.msra.mxu0 0.0
    %359 = vmatprep.subr.mxu0 0.0
    %360 = vmatpush1.msra.mxu0 0.0
    %361 = vmatprep.subr.mxu0 0.0
    %362 = vmatpush1.msra.mxu0 0.0
    %363 = vmatprep.subr.mxu0 0.0
    %364 = vmatpush1.msra.mxu0 0.0
    %365 = vmatprep.subr.mxu0 0.0
    %366 = vmatpush1.msra.mxu0 0.0
    %367 = vmatprep.mubr.f32.mxu0 0.0
    %v368 = vand.u32 %v108, 4294901760
    %369 = vmatmul.mubr.f32.gmra.mrb[0].mxu0 %v368
    %v370 = vpop.f32.mrb[0].mxu0
    %v371 = vadd.f32 %v220, %v370
    %v372 = vpop.f32.mrb[0].mxu0
    %373 = vdwg.mxu0
    %374 = vmatprep.subr.mxu0 0.0
    %v375 = vand.u32 %v109, 4294901760
    %v376 = vsub.f32 %v109, %v375
    %377 = vmatpush1.msra.mxu0 %v376
    %378 = vmatprep.subr.mxu0 0.0
    %v379 = vand.u32 %v110, 4294901760
    %v380 = vsub.f32 %v110, %v379
    %381 = vmatpush1.msra.mxu0 %v380
    %382 = vmatprep.subr.mxu0 0.0
    %v383 = vand.u32 %v111, 4294901760
    %v384 = vsub.f32 %v111, %v383
    %385 = vmatpush1.msra.mxu0 %v384
    %386 = vmatprep.subr.mxu0 0.0
    %v387 = vand.u32 %v112, 4294901760
    %v388 = vsub.f32 %v112, %v387
    %389 = vmatpush1.msra.mxu0 %v388
    %390 = vmatprep.subr.mxu0 0.0
    %v391 = vand.u32 %v113, 4294901760
    %v392 = vsub.f32 %v113, %v391
    %393 = vmatpush1.msra.mxu0 %v392
    %394 = vmatprep.subr.mxu0 0.0
    %v395 = vand.u32 %v114, 4294901760
    %v396 = vsub.f32 %v114, %v395
    %397 = vmatpush1.msra.mxu0 %v396
    %398 = vmatprep.subr.mxu0 0.0
    %v399 = vand.u32 %v115, 4294901760
    %v400 = vsub.f32 %v115, %v399
    %401 = vmatpush1.msra.mxu0 %v400
    %402 = vmatprep.subr.mxu0 0.0
    %v403 = vand.u32 %v116, 4294901760
    %v404 = vsub.f32 %v116, %v403
    %405 = vmatpush1.msra.mxu0 %v404
    %406 = vmatprep.subr.mxu0 0.0
    %v407 = vand.u32 %v117, 4294901760
    %v408 = vsub.f32 %v117, %v407
    %409 = vmatpush1.msra.mxu0 %v408
    %410 = vmatprep.subr.mxu0 0.0
    %v411 = vand.u32 %v118, 4294901760
    %v412 = vsub.f32 %v118, %v411
    %413 = vmatpush1.msra.mxu0 %v412
    %414 = vmatprep.subr.mxu0 0.0
    %v415 = vand.u32 %v119, 4294901760
    %v416 = vsub.f32 %v119, %v415
    %417 = vmatpush1.msra.mxu0 %v416
    %418 = vmatprep.subr.mxu0 0.0
    %v419 = vand.u32 %v120, 4294901760
    %v420 = vsub.f32 %v120, %v419
    %421 = vmatpush1.msra.mxu0 %v420
    %422 = vmatprep.subr.mxu0 0.0
    %v423 = vand.u32 %v121, 4294901760
    %v424 = vsub.f32 %v121, %v423
    %425 = vmatpush1.msra.mxu0 %v424
    %426 = vmatprep.subr.mxu0 0.0
    %v427 = vand.u32 %v122, 4294901760
    %v428 = vsub.f32 %v122, %v427
    %429 = vmatpush1.msra.mxu0 %v428
    %430 = vmatprep.subr.mxu0 0.0
    %v431 = vand.u32 %v123, 4294901760
    %v432 = vsub.f32 %v123, %v431
    %433 = vmatpush1.msra.mxu0 %v432
    %434 = vmatprep.subr.mxu0 0.0
    %v435 = vand.u32 %v124, 4294901760
    %v436 = vsub.f32 %v124, %v435
    %437 = vmatpush1.msra.mxu0 %v436
    %438 = vmatprep.subr.mxu0 0.0
    %439 = vmatpush1.msra.mxu0 0.0
    %440 = vmatprep.subr.mxu0 0.0
    %441 = vmatpush1.msra.mxu0 0.0
    %442 = vmatprep.subr.mxu0 0.0
    %443 = vmatpush1.msra.mxu0 0.0
    %444 = vmatprep.subr.mxu0 0.0
    %445 = vmatpush1.msra.mxu0 0.0
    %446 = vmatprep.subr.mxu0 0.0
    %447 = vmatpush1.msra.mxu0 0.0
    %448 = vmatprep.subr.mxu0 0.0
    %449 = vmatpush1.msra.mxu0 0.0
    %450 = vmatprep.subr.mxu0 0.0
    %451 = vmatpush1.msra.mxu0 0.0
    %452 = vmatprep.subr.mxu0 0.0
    %453 = vmatpush1.msra.mxu0 0.0
    %454 = vmatprep.subr.mxu0 0.0
    %455 = vmatpush1.msra.mxu0 0.0
    %456 = vmatprep.subr.mxu0 0.0
    %457 = vmatpush1.msra.mxu0 0.0
    %458 = vmatprep.subr.mxu0 0.0
    %459 = vmatpush1.msra.mxu0 0.0
    %460 = vmatprep.subr.mxu0 0.0
    %461 = vmatpush1.msra.mxu0 0.0
    %462 = vmatprep.subr.mxu0 0.0
    %463 = vmatpush1.msra.mxu0 0.0
    %464 = vmatprep.subr.mxu0 0.0
    %465 = vmatpush1.msra.mxu0 0.0
    %466 = vmatprep.subr.mxu0 0.0
    %467 = vmatpush1.msra.mxu0 0.0
    %468 = vmatprep.subr.mxu0 0.0
    %469 = vmatpush1.msra.mxu0 0.0
    %470 = vmatprep.mubr.f32.mxu0 0.0
    %v471 = vand.u32 %v108, 4294901760
    %v472 = vsub.f32 %v108, %v471
    %473 = vmatmul.mubr.f32.gmra.mrb[0].mxu0 %v472
    %v474 = vpop.f32.mrb[0].mxu0
    %v475 = vadd.f32 %v371, %v474
    %v476 = vpop.f32.mrb[0].mxu0
    %477 = vdwg.mxu0
    %478 = vmatprep.subr.mxu0 0.0
    %v479 = vand.u32 %v109, 4294901760
    %480 = vmatpush1.msra.mxu0 %v479
    %481 = vmatprep.subr.mxu0 0.0
    %v482 = vand.u32 %v110, 4294901760
    %483 = vmatpush1.msra.mxu0 %v482
    %484 = vmatprep.subr.mxu0 0.0
    %v485 = vand.u32 %v111, 4294901760
    %486 = vmatpush1.msra.mxu0 %v485
    %487 = vmatprep.subr.mxu0 0.0
    %v488 = vand.u32 %v112, 4294901760
    %489 = vmatpush1.msra.mxu0 %v488
    %490 = vmatprep.subr.mxu0 0.0
    %v491 = vand.u32 %v113, 4294901760
    %492 = vmatpush1.msra.mxu0 %v491
    %493 = vmatprep.subr.mxu0 0.0
    %v494 = vand.u32 %v114, 4294901760
    %495 = vmatpush1.msra.mxu0 %v494
    %496 = vmatprep.subr.mxu0 0.0
    %v497 = vand.u32 %v115, 4294901760
    %498 = vmatpush1.msra.mxu0 %v497
    %499 = vmatprep.subr.mxu0 0.0
    %v500 = vand.u32 %v116, 4294901760
    %501 = vmatpush1.msra.mxu0 %v500
    %502 = vmatprep.subr.mxu0 0.0
    %v503 = vand.u32 %v117, 4294901760
    %504 = vmatpush1.msra.mxu0 %v503
    %505 = vmatprep.subr.mxu0 0.0
    %v506 = vand.u32 %v118, 4294901760
    %507 = vmatpush1.msra.mxu0 %v506
    %508 = vmatprep.subr.mxu0 0.0
    %v509 = vand.u32 %v119, 4294901760
    %510 = vmatpush1.msra.mxu0 %v509
    %511 = vmatprep.subr.mxu0 0.0
    %v512 = vand.u32 %v120, 4294901760
    %513 = vmatpush1.msra.mxu0 %v512
    %514 = vmatprep.subr.mxu0 0.0
    %v515 = vand.u32 %v121, 4294901760
    %516 = vmatpush1.msra.mxu0 %v515
    %517 = vmatprep.subr.mxu0 0.0
    %v518 = vand.u32 %v122, 4294901760
    %519 = vmatpush1.msra.mxu0 %v518
    %520 = vmatprep.subr.mxu0 0.0
    %v521 = vand.u32 %v123, 4294901760
    %522 = vmatpush1.msra.mxu0 %v521
    %523 = vmatprep.subr.mxu0 0.0
    %v524 = vand.u32 %v124, 4294901760
    %525 = vmatpush1.msra.mxu0 %v524
    %526 = vmatprep.subr.mxu0 0.0
    %527 = vmatpush1.msra.mxu0 0.0
    %528 = vmatprep.subr.mxu0 0.0
    %529 = vmatpush1.msra.mxu0 0.0
    %530 = vmatprep.subr.mxu0 0.0
    %531 = vmatpush1.msra.mxu0 0.0
    %532 = vmatprep.subr.mxu0 0.0
    %533 = vmatpush1.msra.mxu0 0.0
    %534 = vmatprep.subr.mxu0 0.0
    %535 = vmatpush1.msra.mxu0 0.0
    %536 = vmatprep.subr.mxu0 0.0
    %537 = vmatpush1.msra.mxu0 0.0
    %538 = vmatprep.subr.mxu0 0.0
    %539 = vmatpush1.msra.mxu0 0.0
    %540 = vmatprep.subr.mxu0 0.0
    %541 = vmatpush1.msra.mxu0 0.0
    %542 = vmatprep.subr.mxu0 0.0
    %543 = vmatpush1.msra.mxu0 0.0
    %544 = vmatprep.subr.mxu0 0.0
    %545 = vmatpush1.msra.mxu0 0.0
    %546 = vmatprep.subr.mxu0 0.0
    %547 = vmatpush1.msra.mxu0 0.0
    %548 = vmatprep.subr.mxu0 0.0
    %549 = vmatpush1.msra.mxu0 0.0
    %550 = vmatprep.subr.mxu0 0.0
    %551 = vmatpush1.msra.mxu0 0.0
    %552 = vmatprep.subr.mxu0 0.0
    %553 = vmatpush1.msra.mxu0 0.0
    %554 = vmatprep.subr.mxu0 0.0
    %555 = vmatpush1.msra.mxu0 0.0
    %556 = vmatprep.subr.mxu0 0.0
    %557 = vmatpush1.msra.mxu0 0.0
    %558 = vmatprep.mubr.f32.mxu0 0.0
    %v559 = vand.u32 %v108, 4294901760
    %v560 = vsub.f32 %v108, %v559
    %v561 = vand.u32 %v560, 4294901760
    %562 = vmatmul.mubr.f32.gmra.mrb[0].mxu0 %v561
    %v563 = vpop.f32.mrb[0].mxu0
    %v564 = vadd.f32 %v475, %v563
    %v565 = vpop.f32.mrb[0].mxu0
    %566 = vdwg.mxu0
    %567 = vmatprep.subr.mxu0 0.0
    %v568 = vand.u32 %v109, 4294901760
    %v569 = vsub.f32 %v109, %v568
    %v570 = vand.u32 %v569, 4294901760
    %571 = vmatpush1.msra.mxu0 %v570
    %572 = vmatprep.subr.mxu0 0.0
    %v573 = vand.u32 %v110, 4294901760
    %v574 = vsub.f32 %v110, %v573
    %v575 = vand.u32 %v574, 4294901760
    %576 = vmatpush1.msra.mxu0 %v575
    %577 = vmatprep.subr.mxu0 0.0
    %v578 = vand.u32 %v111, 4294901760
    %v579 = vsub.f32 %v111, %v578
    %v580 = vand.u32 %v579, 4294901760
    %581 = vmatpush1.msra.mxu0 %v580
    %582 = vmatprep.subr.mxu0 0.0
    %v583 = vand.u32 %v112, 4294901760
    %v584 = vsub.f32 %v112, %v583
    %v585 = vand.u32 %v584, 4294901760
    %586 = vmatpush1.msra.mxu0 %v585
    %587 = vmatprep.subr.mxu0 0.0
    %v588 = vand.u32 %v113, 4294901760
    %v589 = vsub.f32 %v113, %v588
    %v590 = vand.u32 %v589, 4294901760
    %591 = vmatpush1.msra.mxu0 %v590
    %592 = vmatprep.subr.mxu0 0.0
    %v593 = vand.u32 %v114, 4294901760
    %v594 = vsub.f32 %v114, %v593
    %v595 = vand.u32 %v594, 4294901760
    %596 = vmatpush1.msra.mxu0 %v595
    %597 = vmatprep.subr.mxu0 0.0
    %v598 = vand.u32 %v115, 4294901760
    %v599 = vsub.f32 %v115, %v598
    %v600 = vand.u32 %v599, 4294901760
    %601 = vmatpush1.msra.mxu0 %v600
    %602 = vmatprep.subr.mxu0 0.0
    %v603 = vand.u32 %v116, 4294901760
    %v604 = vsub.f32 %v116, %v603
    %v605 = vand.u32 %v604, 4294901760
    %606 = vmatpush1.msra.mxu0 %v605
    %607 = vmatprep.subr.mxu0 0.0
    %v608 = vand.u32 %v117, 4294901760
    %v609 = vsub.f32 %v117, %v608
    %v610 = vand.u32 %v609, 4294901760
    %611 = vmatpush1.msra.mxu0 %v610
    %612 = vmatprep.subr.mxu0 0.0
    %v613 = vand.u32 %v118, 4294901760
    %v614 = vsub.f32 %v118, %v613
    %v615 = vand.u32 %v614, 4294901760
    %616 = vmatpush1.msra.mxu0 %v615
    %617 = vmatprep.subr.mxu0 0.0
    %v618 = vand.u32 %v119, 4294901760
    %v619 = vsub.f32 %v119, %v618
    %v620 = vand.u32 %v619, 4294901760
    %621 = vmatpush1.msra.mxu0 %v620
    %622 = vmatprep.subr.mxu0 0.0
    %v623 = vand.u32 %v120, 4294901760
    %v624 = vsub.f32 %v120, %v623
    %v625 = vand.u32 %v624, 4294901760
    %626 = vmatpush1.msra.mxu0 %v625
    %627 = vmatprep.subr.mxu0 0.0
    %v628 = vand.u32 %v121, 4294901760
    %v629 = vsub.f32 %v121, %v628
    %v630 = vand.u32 %v629, 4294901760
    %631 = vmatpush1.msra.mxu0 %v630
    %632 = vmatprep.subr.mxu0 0.0
    %v633 = vand.u32 %v122, 4294901760
    %v634 = vsub.f32 %v122, %v633
    %v635 = vand.u32 %v634, 4294901760
    %636 = vmatpush1.msra.mxu0 %v635
    %637 = vmatprep.subr.mxu0 0.0
    %v638 = vand.u32 %v123, 4294901760
    %v639 = vsub.f32 %v123, %v638
    %v640 = vand.u32 %v639, 4294901760
    %641 = vmatpush1.msra.mxu0 %v640
    %642 = vmatprep.subr.mxu0 0.0
    %v643 = vand.u32 %v124, 4294901760
    %v644 = vsub.f32 %v124, %v643
    %v645 = vand.u32 %v644, 4294901760
    %646 = vmatpush1.msra.mxu0 %v645
    %647 = vmatprep.subr.mxu0 0.0
    %648 = vmatpush1.msra.mxu0 0.0
    %649 = vmatprep.subr.mxu0 0.0
    %650 = vmatpush1.msra.mxu0 0.0
    %651 = vmatprep.subr.mxu0 0.0
    %652 = vmatpush1.msra.mxu0 0.0
    %653 = vmatprep.subr.mxu0 0.0
    %654 = vmatpush1.msra.mxu0 0.0
    %655 = vmatprep.subr.mxu0 0.0
    %656 = vmatpush1.msra.mxu0 0.0
    %657 = vmatprep.subr.mxu0 0.0
    %658 = vmatpush1.msra.mxu0 0.0
    %659 = vmatprep.subr.mxu0 0.0
    %660 = vmatpush1.msra.mxu0 0.0
    %661 = vmatprep.subr.mxu0 0.0
    %662 = vmatpush1.msra.mxu0 0.0
    %663 = vmatprep.subr.mxu0 0.0
    %664 = vmatpush1.msra.mxu0 0.0
    %665 = vmatprep.subr.mxu0 0.0
    %666 = vmatpush1.msra.mxu0 0.0
    %667 = vmatprep.subr.mxu0 0.0
    %668 = vmatpush1.msra.mxu0 0.0
    %669 = vmatprep.subr.mxu0 0.0
    %670 = vmatpush1.msra.mxu0 0.0
    %671 = vmatprep.subr.mxu0 0.0
    %672 = vmatpush1.msra.mxu0 0.0
    %673 = vmatprep.subr.mxu0 0.0
    %674 = vmatpush1.msra.mxu0 0.0
    %675 = vmatprep.subr.mxu0 0.0
    %676 = vmatpush1.msra.mxu0 0.0
    %677 = vmatprep.subr.mxu0 0.0
    %678 = vmatpush1.msra.mxu0 0.0
    %679 = vmatprep.mubr.f32.mxu0 0.0
    %v680 = vand.u32 %v108, 4294901760
    %681 = vmatmul.mubr.f32.gmra.mrb[0].mxu0 %v680
    %v682 = vpop.f32.mrb[0].mxu0
    %v683 = vadd.f32 %v564, %v682
    %v684 = vpop.f32.mrb[0].mxu0
    %685 = vdwg.mxu0
    %686 = vmatprep.subr.mxu0 0.0
    %v687 = vand.u32 %v109, 4294901760
    %688 = vmatpush1.msra.mxu0 %v687
    %689 = vmatprep.subr.mxu0 0.0
    %v690 = vand.u32 %v110, 4294901760
    %691 = vmatpush1.msra.mxu0 %v690
    %692 = vmatprep.subr.mxu0 0.0
    %v693 = vand.u32 %v111, 4294901760
    %694 = vmatpush1.msra.mxu0 %v693
    %695 = vmatprep.subr.mxu0 0.0
    %v696 = vand.u32 %v112, 4294901760
    %697 = vmatpush1.msra.mxu0 %v696
    %698 = vmatprep.subr.mxu0 0.0
    %v699 = vand.u32 %v113, 4294901760
    %700 = vmatpush1.msra.mxu0 %v699
    %701 = vmatprep.subr.mxu0 0.0
    %v702 = vand.u32 %v114, 4294901760
    %703 = vmatpush1.msra.mxu0 %v702
    %704 = vmatprep.subr.mxu0 0.0
    %v705 = vand.u32 %v115, 4294901760
    %706 = vmatpush1.msra.mxu0 %v705
    %707 = vmatprep.subr.mxu0 0.0
    %v708 = vand.u32 %v116, 4294901760
    %709 = vmatpush1.msra.mxu0 %v708
    %710 = vmatprep.subr.mxu0 0.0
    %v711 = vand.u32 %v117, 4294901760
    %712 = vmatpush1.msra.mxu0 %v711
    %713 = vmatprep.subr.mxu0 0.0
    %v714 = vand.u32 %v118, 4294901760
    %715 = vmatpush1.msra.mxu0 %v714
    %716 = vmatprep.subr.mxu0 0.0
    %v717 = vand.u32 %v119, 4294901760
    %718 = vmatpush1.msra.mxu0 %v717
    %719 = vmatprep.subr.mxu0 0.0
    %v720 = vand.u32 %v120, 4294901760
    %721 = vmatpush1.msra.mxu0 %v720
    %722 = vmatprep.subr.mxu0 0.0
    %v723 = vand.u32 %v121, 4294901760
    %724 = vmatpush1.msra.mxu0 %v723
    %725 = vmatprep.subr.mxu0 0.0
    %v726 = vand.u32 %v122, 4294901760
    %727 = vmatpush1.msra.mxu0 %v726
    %728 = vmatprep.subr.mxu0 0.0
    %v729 = vand.u32 %v123, 4294901760
    %730 = vmatpush1.msra.mxu0 %v729
    %731 = vmatprep.subr.mxu0 0.0
    %v732 = vand.u32 %v124, 4294901760
    %733 = vmatpush1.msra.mxu0 %v732
    %734 = vmatprep.subr.mxu0 0.0
    %735 = vmatpush1.msra.mxu0 0.0
    %736 = vmatprep.subr.mxu0 0.0
    %737 = vmatpush1.msra.mxu0 0.0
    %738 = vmatprep.subr.mxu0 0.0
    %739 = vmatpush1.msra.mxu0 0.0
    %740 = vmatprep.subr.mxu0 0.0
    %741 = vmatpush1.msra.mxu0 0.0
    %742 = vmatprep.subr.mxu0 0.0
    %743 = vmatpush1.msra.mxu0 0.0
    %744 = vmatprep.subr.mxu0 0.0
    %745 = vmatpush1.msra.mxu0 0.0
    %746 = vmatprep.subr.mxu0 0.0
    %747 = vmatpush1.msra.mxu0 0.0
    %748 = vmatprep.subr.mxu0 0.0
    %749 = vmatpush1.msra.mxu0 0.0
    %750 = vmatprep.subr.mxu0 0.0
    %751 = vmatpush1.msra.mxu0 0.0
    %752 = vmatprep.subr.mxu0 0.0
    %753 = vmatpush1.msra.mxu0 0.0
    %754 = vmatprep.subr.mxu0 0.0
    %755 = vmatpush1.msra.mxu0 0.0
    %756 = vmatprep.subr.mxu0 0.0
    %757 = vmatpush1.msra.mxu0 0.0
    %758 = vmatprep.subr.mxu0 0.0
    %759 = vmatpush1.msra.mxu0 0.0
    %760 = vmatprep.subr.mxu0 0.0
    %761 = vmatpush1.msra.mxu0 0.0
    %762 = vmatprep.subr.mxu0 0.0
    %763 = vmatpush1.msra.mxu0 0.0
    %764 = vmatprep.subr.mxu0 0.0
    %765 = vmatpush1.msra.mxu0 0.0
    %766 = vmatprep.mubr.f32.mxu0 0.0
    %v767 = vand.u32 %v108, 4294901760
    %768 = vmatmul.mubr.f32.gmra.mrb[0].mxu0 %v767
    %v769 = vpop.f32.mrb[0].mxu0
    %v770 = vadd.f32 %v683, %v769
    %v771 = vpop.f32.mrb[0].mxu0
    %772 = vdwg.mxu0
    %774 = vrot.lane.b32.xlu0 %v770, 127
    %v775 = vpop.permute.xlu0 %774
    %v777 = vmax.f32 %v770, %v775
    %778 = vrot.lane.b32.xlu0 %v770, 126
    %v779 = vpop.permute.xlu0 %778
    %v781 = vmax.f32 %v777, %v779
    %783 = vset.pattern.permute.xlu0 0
    %784 = vperm.xlu0 %783, %v781
    %v785 = vpop.permute.xlu0 %784
    %v787 = vsub.f32 %v770, %v785
    %v788 = vmul.f32 %v787, 1.442695
    %v789 = vpow.pop %v788
    %791 = vrot.lane.b32.xlu0 %v789, 127
    %v792 = vpop.permute.xlu0 %791
    %v794 = vadd.f32 %v789, %v792
    %795 = vrot.lane.b32.xlu0 %v789, 126
    %v796 = vpop.permute.xlu0 %795
    %v798 = vadd.f32 %v794, %v796
    %v799 = vrcp.pop %v798
    %v800 = vmul.f32 %v798, %v799
    %v801 = vsub.f32 2.0, %v800
    %v802 = vmul.f32 %v799, %v801
    %804 = vset.pattern.permute.xlu0 0
    %805 = vperm.xlu0 %804, %v802
    %v806 = vpop.permute.xlu0 %805
    %v808 = vmul.f32 %v789, %v806
    %809 = vst [vmem:[#allocation8] sm:$0xff] %v808
    // Predicated region
    $region34: #{tpu_custom_call.1} parent=1 // pred_check
      _
    $region35: #{tpu_custom_call.1} parent=1 // pred_check_branch
      %811 = sbr.rel (0) target = $region37
    $region36: #{tpu_custom_call.1} parent=1 // pred_region
      %s813 = ssub.s32 128, 128
      %814 = vsyncadd [#allocation4], %s813
      %s816 = sshll.u32 [#allocation8], 4
      %s817 = int_to_ptr.vmem [resolvable:$true] %s816
      %819 = dma.vmem_to_hbm [thread:$0]  %s817, 128, %s5, [#allocation4]
    $region37: #{tpu_custom_call.1} parent=1 // pred_fallthru
      _
    // Predicated region
    $region38: #{tpu_custom_call.1} parent=1 // pred_check
      _
    $region39: #{tpu_custom_call.1} parent=1 // pred_check_branch
      %821 = sbr.rel (0) target = $region41
    $region40: #{tpu_custom_call.1} parent=1 // pred_region
      %822 = dma.done [#allocation4], 128
    $region41: #{tpu_custom_call.1} parent=1 // pred_fallthru
      _
    %823 = vsyncpa [#allocation3], 1
    %824 = vsyncpa [#allocation6], 1
    %825 = vsyncpa [#allocation4], 1

</llo_original>
